<compile_context>
chip_gen: v6e
topology: v6e:2x2x1
jax: 0.10.0
libtpu: 0.0.40
codegen_flags: <defaults>
</compile_context>

<pallas_src>
import math

import jax
import jax.numpy as jnp
from jax.experimental import pallas as pl
from jax.experimental.pallas import tpu as pltpu


_VMEM_BUDGET_CACHE = None


def _vmem_budget():
    """Returns (per-block byte cap, scoped-VMEM limit) tuned per TPU generation."""
    global _VMEM_BUDGET_CACHE
    if _VMEM_BUDGET_CACHE is None:
        cap, limit = 2 * 1024 * 1024, 32 * 1024 * 1024   # safe default (v7x / unknown)
        try:
            info = pltpu.get_tpu_info()
            phys = getattr(info, "vmem_capacity_bytes", None)
            if phys is not None and phys >= 100 * 1024 * 1024:
                # v5e / v6e class: 128 MiB physical VMEM -> bigger tiles.
                cap, limit = 4 * 1024 * 1024, 64 * 1024 * 1024
        except Exception:
            pass
        _VMEM_BUDGET_CACHE = (cap, limit)
    return _VMEM_BUDGET_CACHE


def _copy_kernel(x_ref, o_ref):
    # Pure copy: the permutation lives entirely in the BlockSpec index maps.
    o_ref[...] = x_ref[...]


def _make_transpose_kernel(dims):
    def kernel(x_ref, o_ref):
        o_ref[...] = jnp.transpose(x_ref[...], dims)
    return kernel


def _simplify(shape, dims):
    """Squeeze size-1 axes and coalesce runs of axes that remain adjacent and
    in-order under the permutation.  Returns (new_shape, new_dims).  Both
    transforms preserve the row-major element order of input and output, so
    the caller can reshape freely before/after the reduced-rank permute."""
    n = len(shape)
    keep = [a for a in range(n) if shape[a] > 1]
    rank_map = {a: i for i, a in enumerate(keep)}
    shape1 = tuple(shape[a] for a in keep)
    dims1 = tuple(rank_map[d] for d in dims if d in rank_map)
    if len(shape1) == 0:
        return (), ()
    # Group output positions whose input axes are consecutive and increasing.
    groups = []
    for j, d in enumerate(dims1):
        if j > 0 and d == dims1[j - 1] + 1:
            groups[-1].append(d)
        else:
            groups.append([d])
    order = sorted(range(len(groups)), key=lambda gi: groups[gi][0])
    new_shape = tuple(math.prod(shape1[a] for a in groups[gi]) for gi in order)
    new_axis_of_group = {gi: k for k, gi in enumerate(order)}
    new_dims = tuple(new_axis_of_group[gi] for gi in range(len(groups)))
    return new_shape, new_dims


def _grow_to_cap(block, shape, order, aligns, itemsize, cap_bytes):
    """Grow block dims (in the given axis order) up to cap_bytes per block,
    respecting per-axis alignment (blocks end up aligned multiples or full)."""
    block = list(block)
    for a in order:
        rest = itemsize * math.prod(block) // max(block[a], 1)
        if rest <= 0:
            continue
        budget = cap_bytes // rest
        if budget <= block[a]:
            continue
        al = max(aligns[a], 1)
        new = shape[a] if budget >= shape[a] else (budget // al) * al
        if new > block[a]:
            block[a] = min(new, shape[a])
    return block


def _shrink_to_cap(block, aligns, itemsize, cap_bytes):
    """Halve the largest shrinkable block dim (respecting alignment) until the
    per-block byte size fits under cap_bytes."""
    block = list(block)
    while itemsize * math.prod(block) > cap_bytes:
        cand = [a for a in range(len(block)) if block[a] > max(aligns[a], 1)]
        if not cand:
            break
        a = max(cand, key=lambda i: block[i])
        al = max(aligns[a], 1)
        new = max((block[a] // 2) // al * al, al)
        if new >= block[a]:
            break
        block[a] = new
    return block


def _permute_pallas(x, dims):
    """Reduced-rank permute via pallas_call. `dims` is non-identity, rank >= 2."""
    n = x.ndim
    shape = x.shape
    out_shape = tuple(shape[d] for d in dims)
    inv = [0] * n
    for k, d in enumerate(dims):
        inv[d] = k
    inv = tuple(inv)                       # input axis a feeds output axis inv[a]
    itemsize = x.dtype.itemsize
    cap_bytes, vmem_limit = _vmem_budget()
    sub_align = {4: 8, 2: 16, 1: 32}.get(itemsize, 8)

    in_blk = [1] * n
    aligns = [1] * n
    lane_fixed = (dims[n - 1] == n - 1)

    if lane_fixed:
        # Lane axis stays put: full lane block, dtype-aligned sublane blocks on
        # both the input sublane axis and the axis feeding the output sublane,
        # then grow innermost output axes first.
        in_blk[n - 1] = shape[n - 1]
        aligns[n - 1] = 128
        s = dims[n - 2]                    # source of the output sublane axis
        aligns[s] = max(aligns[s], sub_align)
        aligns[n - 2] = max(aligns[n - 2], sub_align)
        in_blk[s] = max(in_blk[s], min(shape[s], sub_align))
        in_blk[n - 2] = max(in_blk[n - 2], min(shape[n - 2], sub_align))
        grow_order = [dims[j] for j in range(n - 2, -1, -1)]
    else:
        # Lane axis moves: real in-VMEM transpose.  Keep full blocks on the
        # axes participating in the relayout, grow the rest to the cap.
        lane_axes = {n - 1, dims[n - 1]}
        for a in lane_axes:
            in_blk[a] = shape[a]
            aligns[a] = 128
        for a in ({n - 2, dims[n - 2]} - lane_axes):
            in_blk[a] = shape[a]
            aligns[a] = max(aligns[a], sub_align)
        grow_order = [dims[j] for j in range(n - 1, -1, -1)]

    in_blk = _grow_to_cap(in_blk, shape, grow_order, aligns, itemsize, cap_bytes)
    in_blk = _shrink_to_cap(in_blk, aligns, itemsize, cap_bytes)
    in_blk = tuple(in_blk)
    out_blk = tuple(in_blk[d] for d in dims)

    grid = tuple(pl.cdiv(out_shape[k], out_blk[k]) for k in range(n))

    def out_index_map(*g):
        return tuple(g)

    def in_index_map(*g):
        return tuple(g[inv[a]] for a in range(n))

    # If every moved axis has block 1, input and output blocks are identical
    # and the kernel can be a pure copy (permutation lives in the index maps).
    needs_transpose = any(in_blk[a] > 1 and inv[a] != a for a in range(n))
    kernel = _make_transpose_kernel(dims) if needs_transpose else _copy_kernel

    return pl.pallas_call(
        kernel,
        out_shape=jax.ShapeDtypeStruct(out_shape, x.dtype),
        grid=grid,
        in_specs=[pl.BlockSpec(in_blk, in_index_map)],
        out_specs=pl.BlockSpec(out_blk, out_index_map),
        compiler_params=pltpu.CompilerParams(
            # Each output block is written exactly once -> all axes independent.
            dimension_semantics=("parallel",) * n,
            vmem_limit_bytes=vmem_limit,
        ),
    )(x)


def permute(x, dims):
    """Pallas TPU equivalent of torch.Tensor.permute(*dims)."""
    n = x.ndim
    if len(dims) == 1 and isinstance(dims[0], (tuple, list)):
        dims = tuple(dims[0])
    dims = tuple(int(d) % n for d in dims) if n > 0 else tuple(dims)
    assert sorted(dims) == list(range(n)), "dims must be a permutation of range(x.ndim)"

    if n <= 1 or dims == tuple(range(n)):
        return x

    out_shape = tuple(x.shape[d] for d in dims)

    shape_r, dims_r = _simplify(x.shape, dims)
    m = len(shape_r)
    if m <= 1 or dims_r == tuple(range(m)):
        # Only size-1 axes / adjacent in-order runs move: the row-major element
        # order is unchanged, so this is a metadata-only reshape.
        return jnp.reshape(x, out_shape)

    y = _permute_pallas(jnp.reshape(x, shape_r), dims_r)
    return jnp.reshape(y, out_shape)


class Permute:
    """Mirror of the PyTorch module: stores dims at construction time."""

    def __init__(self, *dims):
        self.dims = dims

    def __call__(self, x):
        return permute(x, self.dims)


if __name__ == "__main__":
    key = jax.random.PRNGKey(0)

    def check(x, dims):
        y = Permute(*dims)(x)
        jax.block_until_ready(y)
        ref = jnp.transpose(x, dims)
        assert y.shape == ref.shape and y.dtype == ref.dtype, (y.shape, ref.shape)
        assert jnp.array_equal(y, ref), ("mismatch", x.shape, dims)

    # 1) NCHW -> NHWC, (N=2, C=4, H=16, W=16): lane axis moves; H,W coalesce
    #    into a 256-wide lane axis, in-VMEM transpose path.
    x = jax.random.normal(key, (2, 4, 16, 16), dtype=jnp.float32)
    check(x, (0, 2, 3, 1))

    # 2) (batch, seq, hidden) -> (seq, batch, hidden): lane axis fixed,
    #    grown sublane-dense blocks.
    x2 = jax.random.normal(jax.random.PRNGKey(0), (2, 8, 32), dtype=jnp.float32)
    check(x2, (1, 0, 2))

    # 3) Swap the two leading NCHW axes: trailing (H, W) coalesces into a
    #    lane-dense 256-wide last dim.
    check(x, (1, 0, 2, 3))

    # 4) Odd, non-(8,128)-aligned shapes with coalescing into a 2-D transpose.
    x3 = jax.random.normal(jax.random.PRNGKey(0), (3, 5, 40), dtype=jnp.float32)
    check(x3, (2, 0, 1))

    # 5) bf16 (packed sublanes, dtype-aware alignment): NCHW -> NHWC.
    xb = jax.random.normal(jax.random.PRNGKey(0), (2, 4, 16, 16), dtype=jnp.bfloat16)
    check(xb, (0, 2, 3, 1))

    # 6) Size-1 axis: permutation is identity after simplification -> reshape path.
    x4 = jax.random.normal(jax.random.PRNGKey(0), (2, 1, 8, 32), dtype=jnp.float32)
    check(x4, (1, 0, 2, 3))

    print("KERNEL_OK")
</pallas_src>

<mosaic_0001>
module attributes {stable_mosaic.version = 11 : i64} {
  func.func @kernel(%arg0: i32, %arg1: i32, %arg2: i32, %arg3: memref<2x4x256xf32, #tpu.memory_space<vmem>>, %arg4: memref<2x256x4xf32, #tpu.memory_space<vmem>>) attributes {dimension_semantics = [#tpu.dimension_semantics<parallel>, #tpu.dimension_semantics<parallel>, #tpu.dimension_semantics<parallel>], iteration_bounds = array<i64: 1, 1, 1>, scalar_prefetch = 0 : i64, scratch_operands = 0 : i64, tpu.core_type = #tpu.core_type<tc>, window_params = [{transform_indices = @transform_0, window_bounds = array<i64: 2, 4, 256>}, {transform_indices = @transform_1, window_bounds = array<i64: 2, 256, 4>}]} {
    %c0 = arith.constant 0 : index
    %c0_0 = arith.constant 0 : index
    %c0_1 = arith.constant 0 : index
    %0 = vector.load %arg3[%c0, %c0_0, %c0_1] : memref<2x4x256xf32, #tpu.memory_space<vmem>>, vector<2x4x256xf32>
    %1 = tpu.transpose %0, [0, 2, 1] : vector<2x4x256xf32> -> vector<2x256x4xf32>
    %c0_2 = arith.constant 0 : index
    %c0_3 = arith.constant 0 : index
    %c0_4 = arith.constant 0 : index
    %2 = vector.load %arg4[%c0_2, %c0_3, %c0_4] : memref<2x256x4xf32, #tpu.memory_space<vmem>>, vector<2x256x4xf32>
    tpu.vector_store %arg4[%c0_2, %c0_3, %c0_4], %1 {strides = array<i32>} : memref<2x256x4xf32, #tpu.memory_space<vmem>>, vector<2x256x4xf32>,
    return
  }
  func.func @transform_0(%arg0: i32, %arg1: i32, %arg2: i32) -> (i32, i32, i32) {
    %c0_i32 = arith.constant 0 : i32
    return %arg0, %arg2, %arg1 : i32, i32, i32
  }
  func.func @transform_1(%arg0: i32, %arg1: i32, %arg2: i32) -> (i32, i32, i32) {
    %c0_i32 = arith.constant 0 : i32
    return %arg0, %arg1, %arg2 : i32, i32, i32
  }
}

</mosaic_0001>

<llo_original>
// kernel: tpu_custom_call.1
$region0: #{tpu_custom_call.1}
  #allocation0 [shape = 'u32[]', space=smem, size = 0x4, offset = 0x4, fixed_abs, tag = 'smem constant byte address 0x4 - core index']
  #allocation1 [shape = 'u32[144,128]{1,0:T(1,128)}', space=vmem, size = 0x12000, scoped, tag = 'internal scratch']
  %s0 = inlined_call_operand.hbm [shape: f32[2,4,256], index: 0, kind: input, shape index: {}]
  %s1 = inlined_call_operand.vmem [shape: f32[2,256,4], index: 1, kind: output, shape index: {}]
  %s2 = sld [smem:[#allocation0]]
  $region18: #{tpu_custom_call.1} parent=0
    _
  %s4 = ssub.s32 1, %s2
  %s5 = scalar_select 0, %s4, %s2
  $region1: #{tpu_custom_call.1} parent=0
    #allocation2 [shape = 'u8[8192]{0}', space=vmem, size = 0x2000, scoped, tag = 'input window, operand 0, single buffered']
    #allocation3 [shape = 's32[1]{0}', space=sflag, size = 0x4, scoped, tag = 'scoped memory for tpu_custom_call.1']
    %6 = vsyncpa [#allocation3], 0
    // Predicated region
    $region2: #{tpu_custom_call.1} parent=1 // pred_check
      _
    $region3: #{tpu_custom_call.1} parent=1 // pred_check_branch
      %8 = sbr.rel (0) target = $region5
    $region4: #{tpu_custom_call.1} parent=1 // pred_region
      %s10 = ssub.s32 256, 256
      %11 = vsyncadd [#allocation3], %s10
      %s12 = sshll.u32 [#allocation2], 4
      %s13 = int_to_ptr.vmem [resolvable:$true] %s12
      %18 = dma.hbm_to_vmem [thread:$0]  %s0, 256, %s13, [#allocation3], 128, 128, 8
    $region5: #{tpu_custom_call.1} parent=1 // pred_fallthru
      _
    // Predicated region
    $region6: #{tpu_custom_call.1} parent=1 // pred_check
      _
    $region7: #{tpu_custom_call.1} parent=1 // pred_check_branch
      %20 = sbr.rel (0) target = $region9
    $region8: #{tpu_custom_call.1} parent=1 // pred_region
      %21 = dma.done [#allocation3], 256
    $region9: #{tpu_custom_call.1} parent=1 // pred_fallthru
      _
    %v22 = vld [vmem:[#allocation2] sm:$0xff]
    %v23 = vld [vmem:[#allocation2 + $0x8] sm:$0xff]
    %v26 = vcombine.high %v22, %v22
    %v27 = vcombine.high %v23, %v23
    %30 = vxpose.xlu0.b32.start [1/16] %v22, 128
    %31 = vxpose.xlu0.b32.cont [2/16] 0.0, 128
    %32 = vxpose.xlu0.b32.cont [3/16] 0.0, 128
    %33 = vxpose.xlu0.b32.cont [4/16] 0.0, 128
    %34 = vxpose.xlu0.b32.cont [5/16] 0.0, 128
    %35 = vxpose.xlu0.b32.cont [6/16] 0.0, 128
    %36 = vxpose.xlu0.b32.cont [7/16] 0.0, 128
    %37 = vxpose.xlu0.b32.cont [8/16] 0.0, 128
    %38 = vxpose.xlu0.b32.cont [9/16] 0.0, 128
    %39 = vxpose.xlu0.b32.cont [10/16] 0.0, 128
    %40 = vxpose.xlu0.b32.cont [11/16] 0.0, 128
    %41 = vxpose.xlu0.b32.cont [12/16] 0.0, 128
    %42 = vxpose.xlu0.b32.cont [13/16] 0.0, 128
    %43 = vxpose.xlu0.b32.cont [14/16] 0.0, 128
    %44 = vxpose.xlu0.b32.cont [15/16] 0.0, 128
    %45 = vxpose.xlu0.b32.end [16/16] 0.0, 128
    %v46 = vpop.trf.xlu0
    %v47 = vpop.trf.xlu0
    %v48 = vpop.trf.xlu0
    %v49 = vpop.trf.xlu0
    %v50 = vpop.trf.xlu0
    %v51 = vpop.trf.xlu0
    %v52 = vpop.trf.xlu0
    %v53 = vpop.trf.xlu0
    %v54 = vpop.trf.xlu0
    %v55 = vpop.trf.xlu0
    %v56 = vpop.trf.xlu0
    %v57 = vpop.trf.xlu0
    %v58 = vpop.trf.xlu0
    %v59 = vpop.trf.xlu0
    %v60 = vpop.trf.xlu0
    %v61 = vpop.trf.xlu0
    %62 = vxpose.xlu0.b32.start [1/16] %v26, 128
    %63 = vxpose.xlu0.b32.cont [2/16] 0.0, 128
    %64 = vxpose.xlu0.b32.cont [3/16] 0.0, 128
    %65 = vxpose.xlu0.b32.cont [4/16] 0.0, 128
    %66 = vxpose.xlu0.b32.cont [5/16] 0.0, 128
    %67 = vxpose.xlu0.b32.cont [6/16] 0.0, 128
    %68 = vxpose.xlu0.b32.cont [7/16] 0.0, 128
    %69 = vxpose.xlu0.b32.cont [8/16] 0.0, 128
    %70 = vxpose.xlu0.b32.cont [9/16] 0.0, 128
    %71 = vxpose.xlu0.b32.cont [10/16] 0.0, 128
    %72 = vxpose.xlu0.b32.cont [11/16] 0.0, 128
    %73 = vxpose.xlu0.b32.cont [12/16] 0.0, 128
    %74 = vxpose.xlu0.b32.cont [13/16] 0.0, 128
    %75 = vxpose.xlu0.b32.cont [14/16] 0.0, 128
    %76 = vxpose.xlu0.b32.cont [15/16] 0.0, 128
    %77 = vxpose.xlu0.b32.end [16/16] 0.0, 128
    %v78 = vpop.trf.xlu0
    %v79 = vpop.trf.xlu0
    %v80 = vpop.trf.xlu0
    %v81 = vpop.trf.xlu0
    %v82 = vpop.trf.xlu0
    %v83 = vpop.trf.xlu0
    %v84 = vpop.trf.xlu0
    %v85 = vpop.trf.xlu0
    %v86 = vpop.trf.xlu0
    %v87 = vpop.trf.xlu0
    %v88 = vpop.trf.xlu0
    %v89 = vpop.trf.xlu0
    %v90 = vpop.trf.xlu0
    %v91 = vpop.trf.xlu0
    %v92 = vpop.trf.xlu0
    %v93 = vpop.trf.xlu0
    %94 = vxpose.xlu0.b32.start [1/16] %v23, 128
    %95 = vxpose.xlu0.b32.cont [2/16] 0.0, 128
    %96 = vxpose.xlu0.b32.cont [3/16] 0.0, 128
    %97 = vxpose.xlu0.b32.cont [4/16] 0.0, 128
    %98 = vxpose.xlu0.b32.cont [5/16] 0.0, 128
    %99 = vxpose.xlu0.b32.cont [6/16] 0.0, 128
    %100 = vxpose.xlu0.b32.cont [7/16] 0.0, 128
    %101 = vxpose.xlu0.b32.cont [8/16] 0.0, 128
    %102 = vxpose.xlu0.b32.cont [9/16] 0.0, 128
    %103 = vxpose.xlu0.b32.cont [10/16] 0.0, 128
    %104 = vxpose.xlu0.b32.cont [11/16] 0.0, 128
    %105 = vxpose.xlu0.b32.cont [12/16] 0.0, 128
    %106 = vxpose.xlu0.b32.cont [13/16] 0.0, 128
    %107 = vxpose.xlu0.b32.cont [14/16] 0.0, 128
    %108 = vxpose.xlu0.b32.cont [15/16] 0.0, 128
    %109 = vxpose.xlu0.b32.end [16/16] 0.0, 128
    %v110 = vpop.trf.xlu0
    %v111 = vpop.trf.xlu0
    %v112 = vpop.trf.xlu0
    %v113 = vpop.trf.xlu0
    %v114 = vpop.trf.xlu0
    %v115 = vpop.trf.xlu0
    %v116 = vpop.trf.xlu0
    %v117 = vpop.trf.xlu0
    %v118 = vpop.trf.xlu0
    %v119 = vpop.trf.xlu0
    %v120 = vpop.trf.xlu0
    %v121 = vpop.trf.xlu0
    %v122 = vpop.trf.xlu0
    %v123 = vpop.trf.xlu0
    %v124 = vpop.trf.xlu0
    %v125 = vpop.trf.xlu0
    %126 = vxpose.xlu0.b32.start [1/16] %v27, 128
    %127 = vxpose.xlu0.b32.cont [2/16] 0.0, 128
    %128 = vxpose.xlu0.b32.cont [3/16] 0.0, 128
    %129 = vxpose.xlu0.b32.cont [4/16] 0.0, 128
    %130 = vxpose.xlu0.b32.cont [5/16] 0.0, 128
    %131 = vxpose.xlu0.b32.cont [6/16] 0.0, 128
    %132 = vxpose.xlu0.b32.cont [7/16] 0.0, 128
    %133 = vxpose.xlu0.b32.cont [8/16] 0.0, 128
    %134 = vxpose.xlu0.b32.cont [9/16] 0.0, 128
    %135 = vxpose.xlu0.b32.cont [10/16] 0.0, 128
    %136 = vxpose.xlu0.b32.cont [11/16] 0.0, 128
    %137 = vxpose.xlu0.b32.cont [12/16] 0.0, 128
    %138 = vxpose.xlu0.b32.cont [13/16] 0.0, 128
    %139 = vxpose.xlu0.b32.cont [14/16] 0.0, 128
    %140 = vxpose.xlu0.b32.cont [15/16] 0.0, 128
    %141 = vxpose.xlu0.b32.end [16/16] 0.0, 128
    %v142 = vpop.trf.xlu0
    %v143 = vpop.trf.xlu0
    %v144 = vpop.trf.xlu0
    %v145 = vpop.trf.xlu0
    %v146 = vpop.trf.xlu0
    %v147 = vpop.trf.xlu0
    %v148 = vpop.trf.xlu0
    %v149 = vpop.trf.xlu0
    %v150 = vpop.trf.xlu0
    %v151 = vpop.trf.xlu0
    %v152 = vpop.trf.xlu0
    %v153 = vpop.trf.xlu0
    %v154 = vpop.trf.xlu0
    %v155 = vpop.trf.xlu0
    %v156 = vpop.trf.xlu0
    %v157 = vpop.trf.xlu0
    %vm158 = vcmask 31744
    %159 = vst.msk [vmem:[%s1] sm:$0xff] %vm158, %v46
    %160 = vst.msk [vmem:[%s1 + $0x8] sm:$0xff] %vm158, %v47
    %161 = vst.msk [vmem:[%s1 + $0x10] sm:$0xff] %vm158, %v48
    %162 = vst.msk [vmem:[%s1 + $0x18] sm:$0xff] %vm158, %v49
    %163 = vst.msk [vmem:[%s1 + $0x20] sm:$0xff] %vm158, %v50
    %164 = vst.msk [vmem:[%s1 + $0x28] sm:$0xff] %vm158, %v51
    %165 = vst.msk [vmem:[%s1 + $0x30] sm:$0xff] %vm158, %v52
    %166 = vst.msk [vmem:[%s1 + $0x38] sm:$0xff] %vm158, %v53
    %167 = vst.msk [vmem:[%s1 + $0x40] sm:$0xff] %vm158, %v54
    %168 = vst.msk [vmem:[%s1 + $0x48] sm:$0xff] %vm158, %v55
    %169 = vst.msk [vmem:[%s1 + $0x50] sm:$0xff] %vm158, %v56
    %170 = vst.msk [vmem:[%s1 + $0x58] sm:$0xff] %vm158, %v57
    %171 = vst.msk [vmem:[%s1 + $0x60] sm:$0xff] %vm158, %v58
    %172 = vst.msk [vmem:[%s1 + $0x68] sm:$0xff] %vm158, %v59
    %173 = vst.msk [vmem:[%s1 + $0x70] sm:$0xff] %vm158, %v60
    %174 = vst.msk [vmem:[%s1 + $0x78] sm:$0xff] %vm158, %v61
    %175 = vst.msk [vmem:[%s1 + $0x80] sm:$0xff] %vm158, %v78
    %176 = vst.msk [vmem:[%s1 + $0x88] sm:$0xff] %vm158, %v79
    %177 = vst.msk [vmem:[%s1 + $0x90] sm:$0xff] %vm158, %v80
    %178 = vst.msk [vmem:[%s1 + $0x98] sm:$0xff] %vm158, %v81
    %179 = vst.msk [vmem:[%s1 + $0xa0] sm:$0xff] %vm158, %v82
    %180 = vst.msk [vmem:[%s1 + $0xa8] sm:$0xff] %vm158, %v83
    %181 = vst.msk [vmem:[%s1 + $0xb0] sm:$0xff] %vm158, %v84
    %182 = vst.msk [vmem:[%s1 + $0xb8] sm:$0xff] %vm158, %v85
    %183 = vst.msk [vmem:[%s1 + $0xc0] sm:$0xff] %vm158, %v86
    %184 = vst.msk [vmem:[%s1 + $0xc8] sm:$0xff] %vm158, %v87
    %185 = vst.msk [vmem:[%s1 + $0xd0] sm:$0xff] %vm158, %v88
    %186 = vst.msk [vmem:[%s1 + $0xd8] sm:$0xff] %vm158, %v89
    %187 = vst.msk [vmem:[%s1 + $0xe0] sm:$0xff] %vm158, %v90
    %188 = vst.msk [vmem:[%s1 + $0xe8] sm:$0xff] %vm158, %v91
    %189 = vst.msk [vmem:[%s1 + $0xf0] sm:$0xff] %vm158, %v92
    %190 = vst.msk [vmem:[%s1 + $0xf8] sm:$0xff] %vm158, %v93
    %191 = vst.msk [vmem:[%s1 + $0x100] sm:$0xff] %vm158, %v110
    %192 = vst.msk [vmem:[%s1 + $0x108] sm:$0xff] %vm158, %v111
    %193 = vst.msk [vmem:[%s1 + $0x110] sm:$0xff] %vm158, %v112
    %194 = vst.msk [vmem:[%s1 + $0x118] sm:$0xff] %vm158, %v113
    %195 = vst.msk [vmem:[%s1 + $0x120] sm:$0xff] %vm158, %v114
    %196 = vst.msk [vmem:[%s1 + $0x128] sm:$0xff] %vm158, %v115
    %197 = vst.msk [vmem:[%s1 + $0x130] sm:$0xff] %vm158, %v116
    %198 = vst.msk [vmem:[%s1 + $0x138] sm:$0xff] %vm158, %v117
    %199 = vst.msk [vmem:[%s1 + $0x140] sm:$0xff] %vm158, %v118
    %200 = vst.msk [vmem:[%s1 + $0x148] sm:$0xff] %vm158, %v119
    %201 = vst.msk [vmem:[%s1 + $0x150] sm:$0xff] %vm158, %v120
    %202 = vst.msk [vmem:[%s1 + $0x158] sm:$0xff] %vm158, %v121
    %203 = vst.msk [vmem:[%s1 + $0x160] sm:$0xff] %vm158, %v122
    %204 = vst.msk [vmem:[%s1 + $0x168] sm:$0xff] %vm158, %v123
    %205 = vst.msk [vmem:[%s1 + $0x170] sm:$0xff] %vm158, %v124
    %206 = vst.msk [vmem:[%s1 + $0x178] sm:$0xff] %vm158, %v125
    %207 = vst.msk [vmem:[%s1 + $0x180] sm:$0xff] %vm158, %v142
    %208 = vst.msk [vmem:[%s1 + $0x188] sm:$0xff] %vm158, %v143
    %209 = vst.msk [vmem:[%s1 + $0x190] sm:$0xff] %vm158, %v144
    %210 = vst.msk [vmem:[%s1 + $0x198] sm:$0xff] %vm158, %v145
    %211 = vst.msk [vmem:[%s1 + $0x1a0] sm:$0xff] %vm158, %v146
    %212 = vst.msk [vmem:[%s1 + $0x1a8] sm:$0xff] %vm158, %v147
    %213 = vst.msk [vmem:[%s1 + $0x1b0] sm:$0xff] %vm158, %v148
    %214 = vst.msk [vmem:[%s1 + $0x1b8] sm:$0xff] %vm158, %v149
    %215 = vst.msk [vmem:[%s1 + $0x1c0] sm:$0xff] %vm158, %v150
    %216 = vst.msk [vmem:[%s1 + $0x1c8] sm:$0xff] %vm158, %v151
    %217 = vst.msk [vmem:[%s1 + $0x1d0] sm:$0xff] %vm158, %v152
    %218 = vst.msk [vmem:[%s1 + $0x1d8] sm:$0xff] %vm158, %v153
    %219 = vst.msk [vmem:[%s1 + $0x1e0] sm:$0xff] %vm158, %v154
    %220 = vst.msk [vmem:[%s1 + $0x1e8] sm:$0xff] %vm158, %v155
    %221 = vst.msk [vmem:[%s1 + $0x1f0] sm:$0xff] %vm158, %v156
    %222 = vst.msk [vmem:[%s1 + $0x1f8] sm:$0xff] %vm158, %v157
    // Predicated region
    $region10: #{tpu_custom_call.1} parent=1 // pred_check
      _
    $region11: #{tpu_custom_call.1} parent=1 // pred_check_branch
      %224 = sbr.rel (0) target = $region13
    $region12: #{tpu_custom_call.1} parent=1 // pred_region
      _
    $region13: #{tpu_custom_call.1} parent=1 // pred_fallthru
      _
    // Predicated region
    $region14: #{tpu_custom_call.1} parent=1 // pred_check
      _
    $region15: #{tpu_custom_call.1} parent=1 // pred_check_branch
      %226 = sbr.rel (0) target = $region17
    $region16: #{tpu_custom_call.1} parent=1 // pred_region
      _
    $region17: #{tpu_custom_call.1} parent=1 // pred_fallthru
      _
    %227 = vsyncpa [#allocation3], 1

</llo_original>
